<compile_context>
chip_gen: v6e
topology: v6e:2x2x1
jax: 0.10.0
libtpu: 0.0.40
codegen_flags: <defaults>
</compile_context>

<pallas_src>
import functools

import jax
import jax.numpy as jnp
from jax.experimental import pallas as pl
from jax.experimental.pallas import tpu as pltpu

IN_DIM = 784
H1_PAD = 128   # logical 112, zero-padded
H2_PAD = 128   # logical 16,  zero-padded
OUT_PAD = 128  # logical 10,  zero-padded (lane-dense store)
OUT_DIM = 10
NEG_BIG = -1e30  # finite "-inf" for masked pad logits


def linearnet_kernel(x_ref, w1_ref, b1_ref, w2_ref, b2_ref, w3_ref, b3_ref, o_ref):
    # Cast x to bf16 in-kernel (free VPU work; avoids a separate XLA cast pass).
    x = x_ref[...].astype(jnp.bfloat16)
    # --- layer 1: (TM,784)bf16 @ (784,128)bf16 -> f32, +bias, ReLU ---
    h1 = jnp.dot(x, w1_ref[...], preferred_element_type=jnp.float32)
    h1 = jnp.maximum(h1 + b1_ref[...], 0.0)
    # --- layer 2: (TM,128) @ (128,128) -> f32, +bias, ReLU ---
    h2 = jnp.dot(h1.astype(w2_ref.dtype), w2_ref[...],
                 preferred_element_type=jnp.float32)
    h2 = jnp.maximum(h2 + b2_ref[...], 0.0)
    # --- layer 3: (TM,128) @ (128,128) -> f32, +bias ---
    logits = jnp.dot(h2.astype(w3_ref.dtype), w3_ref[...],
                     preferred_element_type=jnp.float32) + b3_ref[...]
    # Mask padded logit columns (>= OUT_DIM) so they do not contaminate the
    # softmax normalizer.
    col = jax.lax.broadcasted_iota(jnp.int32, logits.shape, dimension=1)
    logits = jnp.where(col < OUT_DIM, logits, NEG_BIG)
    # --- numerically-stable log_softmax over last axis ---
    m = jnp.max(logits, axis=-1, keepdims=True)
    shifted = logits - m
    lse = jnp.log(jnp.sum(jnp.exp(shifted), axis=-1, keepdims=True))
    o_ref[...] = (shifted - lse).astype(o_ref.dtype)


def _round_up(n, m):
    return ((n + m - 1) // m) * m


def _choose_tm(B, tm):
    # Round to 16 to match bf16 sublane packing ([16,128] per bf16 vreg).
    TM = min(tm, _round_up(B, 16))
    # Prefer >= 2 grid steps when the batch allows it, so the "parallel" batch
    # axis can shard across v7x's two TensorCores (no-op on v5e/v6e).
    if B <= TM and B >= 32:
        TM = _round_up(pl.cdiv(B, 2), 16)
    return TM


@functools.partial(jax.jit, static_argnames=("tm",))
def linearnet_forward_padded(x, padded_params, tm=1024):
    """x: (B, 1, 28, 28) or anything flattening to (-1, 784), any float dtype.

    Returns the padded, lane-dense (Bp, 128) bfloat16 log-prob block; the
    consumer slices [:B, :OUT_DIM] (so the slice can fuse downstream instead of
    costing an extra HBM pass here).
    """
    w1, b1, w2, b2, w3, b3 = padded_params
    xf = x.reshape(-1, IN_DIM)
    B = xf.shape[0]

    TM = _choose_tm(B, tm)
    Bp = _round_up(B, TM)
    if Bp != B:
        xf = jnp.pad(xf, ((0, Bp - B), (0, 0)))

    grid = (Bp // TM,)
    const = lambda i: (0, 0)  # weights/biases: same block every step -> resident

    weight_bytes = (IN_DIM * H1_PAD + H1_PAD * H2_PAD + H2_PAD * OUT_PAD) * 2
    cost = pl.CostEstimate(
        flops=2 * Bp * (IN_DIM * H1_PAD + H1_PAD * H2_PAD + H2_PAD * OUT_PAD),
        transcendentals=Bp * OUT_PAD,
        bytes_accessed=(Bp * IN_DIM * xf.dtype.itemsize   # x stream
                        + weight_bytes + 3 * OUT_PAD * 4  # resident params
                        + Bp * OUT_PAD * 2),              # bf16 writeback
    )

    out = pl.pallas_call(
        linearnet_kernel,
        out_shape=jax.ShapeDtypeStruct((Bp, OUT_PAD), jnp.bfloat16),
        grid=grid,
        in_specs=[
            pl.BlockSpec((TM, IN_DIM), lambda i: (i, 0)),
            pl.BlockSpec((IN_DIM, H1_PAD), const),
            pl.BlockSpec((1, H1_PAD), const),
            pl.BlockSpec((H1_PAD, H2_PAD), const),
            pl.BlockSpec((1, H2_PAD), const),
            pl.BlockSpec((H2_PAD, OUT_PAD), const),
            pl.BlockSpec((1, OUT_PAD), const),
        ],
        out_specs=pl.BlockSpec((TM, OUT_PAD), lambda i: (i, 0)),
        compiler_params=pltpu.CompilerParams(
            dimension_semantics=("parallel",)),
        cost_estimate=cost,
    )(xf, w1, b1, w2, b2, w3, b3)

    return out


def linearnet_forward(x, padded_params, tm=1024):
    """Convenience wrapper: padded kernel output sliced to the logical (B, 10)."""
    B = x.reshape(-1, IN_DIM).shape[0]
    out = linearnet_forward_padded(x, padded_params, tm=tm)
    return out[:B, :OUT_DIM].astype(jnp.float32)


def init_params(key):
    """Logical (unpadded, f32) params mirroring nn.Linear (weights transposed)."""
    ks = jax.random.split(key, 6)

    def lin(kw, kb, fan_in, fan_out):
        bound = 1.0 / jnp.sqrt(fan_in)
        w = jax.random.uniform(kw, (fan_in, fan_out), jnp.float32, -bound, bound)
        b = jax.random.uniform(kb, (1, fan_out), jnp.float32, -bound, bound)
        return w, b

    w1, b1 = lin(ks[0], ks[1], 784, 112)
    w2, b2 = lin(ks[2], ks[3], 112, 16)
    w3, b3 = lin(ks[4], ks[5], 16, 10)
    return (w1, b1, w2, b2, w3, b3)


def pad_params(params):
    """Zero-pad hidden/output widths to 128 lanes; weights -> bf16, biases f32."""
    w1, b1, w2, b2, w3, b3 = params

    def padw(w, rows, cols):
        out = jnp.zeros((rows, cols), jnp.float32).at[: w.shape[0], : w.shape[1]].set(w)
        return out.astype(jnp.bfloat16)

    def padb(b, cols):
        return jnp.zeros((1, cols), jnp.float32).at[:, : b.shape[1]].set(b)

    return (
        padw(w1, IN_DIM, H1_PAD), padb(b1, H1_PAD),
        padw(w2, H1_PAD, H2_PAD), padb(b2, H2_PAD),
        padw(w3, H2_PAD, OUT_PAD), padb(b3, OUT_PAD),
    )


def reference_forward(x, params):
    """Plain-JAX f32 reference (PyTorch semantics)."""
    w1, b1, w2, b2, w3, b3 = params
    xf = x.reshape(-1, IN_DIM).astype(jnp.float32)
    h1 = jnp.maximum(xf @ w1 + b1, 0.0)
    h2 = jnp.maximum(h1 @ w2 + b2, 0.0)
    logits = h2 @ w3 + b3
    return jax.nn.log_softmax(logits, axis=-1)


if __name__ == "__main__":
    key = jax.random.PRNGKey(0)
    kx, kp = jax.random.split(key)

    # Small MNIST-like input: batch=8, NCHW (8, 1, 28, 28) -> flattens to (8, 784).
    # NOTE: at B=8 the call is launch-overhead dominated; the tiling/bf16 wins
    # show up at B >= 1024 (the kernel handles arbitrary B by padding to TM).
    B = 8
    x = jax.random.normal(kx, (B, 1, 28, 28), dtype=jnp.float32)
    params = init_params(kp)
    padded = pad_params(params)

    out_padded = linearnet_forward_padded(x, padded)
    jax.block_until_ready(out_padded)

    # Consumer-side slice of the padded lane-dense block (fusable downstream).
    out = out_padded[:B, :OUT_DIM].astype(jnp.float32)

    assert out.shape == (B, OUT_DIM)
    assert bool(jnp.all(jnp.isfinite(out)))
    # log_softmax rows should sum to ~1 in prob space (bf16 storage tolerance)
    assert jnp.allclose(jnp.sum(jnp.exp(out), axis=-1), 1.0, atol=1e-2)
    # match the f32 reference (bf16 matmul + bf16 storage tolerance)
    ref = reference_forward(x, params)
    assert jnp.max(jnp.abs(out - ref)) < 5e-2

    print("KERNEL_OK")
</pallas_src>

<mosaic_0001>
module attributes {stable_mosaic.version = 11 : i64} {
  func.func @linearnet_kernel(%arg0: i32, %arg1: memref<16x784xf32, #tpu.memory_space<vmem>>, %arg2: memref<784x128xbf16, #tpu.memory_space<vmem>>, %arg3: memref<1x128xf32, #tpu.memory_space<vmem>>, %arg4: memref<128x128xbf16, #tpu.memory_space<vmem>>, %arg5: memref<1x128xf32, #tpu.memory_space<vmem>>, %arg6: memref<128x128xbf16, #tpu.memory_space<vmem>>, %arg7: memref<1x128xf32, #tpu.memory_space<vmem>>, %arg8: memref<16x128xbf16, #tpu.memory_space<vmem>>) attributes {dimension_semantics = [#tpu.dimension_semantics<parallel>], iteration_bounds = array<i64: 1>, scalar_prefetch = 0 : i64, scratch_operands = 0 : i64, tpu.core_type = #tpu.core_type<tc>, window_params = [{transform_indices = @transform_0, window_bounds = array<i64: 16, 784>}, {pipeline_mode = #tpu.pipeline_mode<synchronous>, transform_indices = @transform_1, window_bounds = array<i64: 784, 128>}, {pipeline_mode = #tpu.pipeline_mode<synchronous>, transform_indices = @transform_2, window_bounds = array<i64: 1, 128>}, {pipeline_mode = #tpu.pipeline_mode<synchronous>, transform_indices = @transform_3, window_bounds = array<i64: 128, 128>}, {pipeline_mode = #tpu.pipeline_mode<synchronous>, transform_indices = @transform_4, window_bounds = array<i64: 1, 128>}, {pipeline_mode = #tpu.pipeline_mode<synchronous>, transform_indices = @transform_5, window_bounds = array<i64: 128, 128>}, {pipeline_mode = #tpu.pipeline_mode<synchronous>, transform_indices = @transform_6, window_bounds = array<i64: 1, 128>}, {transform_indices = @transform_7, window_bounds = array<i64: 16, 128>}]} {
    %c0 = arith.constant 0 : index
    %c0_0 = arith.constant 0 : index
    %0 = vector.load %arg1[%c0, %c0_0] : memref<16x784xf32, #tpu.memory_space<vmem>>, vector<16x784xf32>
    %1 = arith.truncf %0 : vector<16x784xf32> to vector<16x784xbf16>
    %c0_1 = arith.constant 0 : index
    %c0_2 = arith.constant 0 : index
    %2 = vector.load %arg2[%c0_1, %c0_2] : memref<784x128xbf16, #tpu.memory_space<vmem>>, vector<784x128xbf16>
    %cst = arith.constant dense<0.000000e+00> : vector<16x128xf32>
    %3 = tpu.matmul %1, %2, %cst {dimension_numbers = #tpu.dot_dimension_numbers<[1], [0], [0], [1], [0, 0, 1, 1], [], []>} : vector<16x784xbf16>, vector<784x128xbf16>, vector<16x128xf32> -> vector<16x128xf32>
    %c0_3 = arith.constant 0 : index
    %c0_4 = arith.constant 0 : index
    %4 = vector.load %arg3[%c0_3, %c0_4] : memref<1x128xf32, #tpu.memory_space<vmem>>, vector<1x128xf32>
    %5 = vector.broadcast %4 : vector<1x128xf32> to vector<16x128xf32>
    %6 = arith.addf %3, %5 : vector<16x128xf32>
    %cst_5 = arith.constant 0.000000e+00 : f32
    %7 = vector.broadcast %cst_5 : f32 to vector<16x128xf32>
    %8 = arith.maximumf %6, %7 : vector<16x128xf32>
    %9 = arith.truncf %8 : vector<16x128xf32> to vector<16x128xbf16>
    %c0_6 = arith.constant 0 : index
    %c0_7 = arith.constant 0 : index
    %10 = vector.load %arg4[%c0_6, %c0_7] : memref<128x128xbf16, #tpu.memory_space<vmem>>, vector<128x128xbf16>
    %cst_8 = arith.constant dense<0.000000e+00> : vector<16x128xf32>
    %11 = tpu.matmul %9, %10, %cst_8 {dimension_numbers = #tpu.dot_dimension_numbers<[1], [0], [0], [1], [0, 0, 1, 1], [], []>} : vector<16x128xbf16>, vector<128x128xbf16>, vector<16x128xf32> -> vector<16x128xf32>
    %c0_9 = arith.constant 0 : index
    %c0_10 = arith.constant 0 : index
    %12 = vector.load %arg5[%c0_9, %c0_10] : memref<1x128xf32, #tpu.memory_space<vmem>>, vector<1x128xf32>
    %13 = vector.broadcast %12 : vector<1x128xf32> to vector<16x128xf32>
    %14 = arith.addf %11, %13 : vector<16x128xf32>
    %cst_11 = arith.constant 0.000000e+00 : f32
    %15 = vector.broadcast %cst_11 : f32 to vector<16x128xf32>
    %16 = arith.maximumf %14, %15 : vector<16x128xf32>
    %17 = arith.truncf %16 : vector<16x128xf32> to vector<16x128xbf16>
    %c0_12 = arith.constant 0 : index
    %c0_13 = arith.constant 0 : index
    %18 = vector.load %arg6[%c0_12, %c0_13] : memref<128x128xbf16, #tpu.memory_space<vmem>>, vector<128x128xbf16>
    %cst_14 = arith.constant dense<0.000000e+00> : vector<16x128xf32>
    %19 = tpu.matmul %17, %18, %cst_14 {dimension_numbers = #tpu.dot_dimension_numbers<[1], [0], [0], [1], [0, 0, 1, 1], [], []>} : vector<16x128xbf16>, vector<128x128xbf16>, vector<16x128xf32> -> vector<16x128xf32>
    %c0_15 = arith.constant 0 : index
    %c0_16 = arith.constant 0 : index
    %20 = vector.load %arg7[%c0_15, %c0_16] : memref<1x128xf32, #tpu.memory_space<vmem>>, vector<1x128xf32>
    %21 = vector.broadcast %20 : vector<1x128xf32> to vector<16x128xf32>
    %22 = arith.addf %19, %21 : vector<16x128xf32>
    %23 = tpu.iota {dimensions = array<i32: 1>} : vector<16x128xi32>
    %c10_i32 = arith.constant 10 : i32
    %24 = vector.broadcast %c10_i32 : i32 to vector<16x128xi32>
    %25 = arith.cmpi slt, %23, %24 : vector<16x128xi32>
    %cst_17 = arith.constant -1.000000e+30 : f32
    %26 = vector.broadcast %cst_17 : f32 to vector<16x128xf32>
    %27 = arith.select %25, %22, %26 : vector<16x128xi1>, vector<16x128xf32>
    %cst_18 = arith.constant dense<0xFF800000> : vector<16xf32>
    %28 = vector.multi_reduction <maximumf>, %27, %cst_18 [1] : vector<16x128xf32> to vector<16xf32>
    %29 = vector.shape_cast %28 : vector<16xf32> to vector<16x1xf32>
    %30 = vector.broadcast %29 : vector<16x1xf32> to vector<16x128xf32>
    %31 = arith.subf %27, %30 : vector<16x128xf32>
    %32 = math.exp %31 : vector<16x128xf32>
    %cst_19 = arith.constant dense<0.000000e+00> : vector<16xf32>
    %33 = vector.multi_reduction <add>, %32, %cst_19 [1] : vector<16x128xf32> to vector<16xf32>
    %34 = vector.shape_cast %33 : vector<16xf32> to vector<16x1xf32>
    %35 = math.log %34 : vector<16x1xf32>
    %36 = vector.broadcast %35 : vector<16x1xf32> to vector<16x128xf32>
    %37 = arith.subf %31, %36 : vector<16x128xf32>
    %38 = arith.truncf %37 : vector<16x128xf32> to vector<16x128xbf16>
    %c0_20 = arith.constant 0 : index
    %c0_21 = arith.constant 0 : index
    %39 = vector.load %arg8[%c0_20, %c0_21] : memref<16x128xbf16, #tpu.memory_space<vmem>>, vector<16x128xbf16>
    tpu.vector_store %arg8[%c0_20, %c0_21], %38 {strides = array<i32>} : memref<16x128xbf16, #tpu.memory_space<vmem>>, vector<16x128xbf16>,
    return
  }
  func.func @transform_0(%arg0: i32) -> (i32, i32) {
    %c0_i32 = arith.constant 0 : i32
    %c0_i32_0 = arith.constant 0 : i32
    return %arg0, %c0_i32 : i32, i32
  }
  func.func @transform_1(%arg0: i32) -> (i32, i32) {
    %c0_i32 = arith.constant 0 : i32
    %c0_i32_0 = arith.constant 0 : i32
    %c0_i32_1 = arith.constant 0 : i32
    return %c0_i32, %c0_i32_0 : i32, i32
  }
  func.func @transform_2(%arg0: i32) -> (i32, i32) {
    %c0_i32 = arith.constant 0 : i32
    %c0_i32_0 = arith.constant 0 : i32
    %c0_i32_1 = arith.constant 0 : i32
    return %c0_i32, %c0_i32_0 : i32, i32
  }
  func.func @transform_3(%arg0: i32) -> (i32, i32) {
    %c0_i32 = arith.constant 0 : i32
    %c0_i32_0 = arith.constant 0 : i32
    %c0_i32_1 = arith.constant 0 : i32
    return %c0_i32, %c0_i32_0 : i32, i32
  }
  func.func @transform_4(%arg0: i32) -> (i32, i32) {
    %c0_i32 = arith.constant 0 : i32
    %c0_i32_0 = arith.constant 0 : i32
    %c0_i32_1 = arith.constant 0 : i32
    return %c0_i32, %c0_i32_0 : i32, i32
  }
  func.func @transform_5(%arg0: i32) -> (i32, i32) {
    %c0_i32 = arith.constant 0 : i32
    %c0_i32_0 = arith.constant 0 : i32
    %c0_i32_1 = arith.constant 0 : i32
    return %c0_i32, %c0_i32_0 : i32, i32
  }
  func.func @transform_6(%arg0: i32) -> (i32, i32) {
    %c0_i32 = arith.constant 0 : i32
    %c0_i32_0 = arith.constant 0 : i32
    %c0_i32_1 = arith.constant 0 : i32
    return %c0_i32, %c0_i32_0 : i32, i32
  }
  func.func @transform_7(%arg0: i32) -> (i32, i32) {
    %c0_i32 = arith.constant 0 : i32
    %c0_i32_0 = arith.constant 0 : i32
    return %arg0, %c0_i32 : i32, i32
  }
}

</mosaic_0001>

<llo_original>
// kernel: linearnet_forward_padded.1
$region0: #{linearnet_forward_padded.1}
  #allocation0 [shape = 'u32[]', space=smem, size = 0x4, offset = 0x4, fixed_abs, tag = 'smem constant byte address 0x4 - core index']
  #allocation1 [shape = 'u32[144,128]{1,0:T(1,128)}', space=vmem, size = 0x12000, scoped, tag = 'internal scratch']
  %s0 = inlined_call_operand.vmem [shape: f32[16,784], index: 0, kind: input, shape index: {}]
  %s1 = inlined_call_operand.vmem [shape: bf16[784,128], index: 1, kind: input, shape index: {}]
  %s2 = inlined_call_operand.vmem [shape: f32[1,128], index: 2, kind: input, shape index: {}]
  %s3 = inlined_call_operand.vmem [shape: bf16[128,128], index: 3, kind: input, shape index: {}]
  %s4 = inlined_call_operand.vmem [shape: f32[1,128], index: 4, kind: input, shape index: {}]
  %s5 = inlined_call_operand.vmem [shape: bf16[128,128], index: 5, kind: input, shape index: {}]
  %s6 = inlined_call_operand.vmem [shape: f32[1,128], index: 6, kind: input, shape index: {}]
  %s7 = inlined_call_operand.hbm [shape: bf16[16,128], index: 7, kind: output, shape index: {}]
  %s8 = sld [smem:[#allocation0]]
  $region38: #{linearnet_forward_padded.1} parent=0
    _
  %s10 = ssub.s32 1, %s8
  %s11 = scalar_select 0, %s10, %s8
  $region1: #{linearnet_forward_padded.1} parent=0
    #allocation2 [shape = 'u8[4096]{0}', space=vmem, size = 0x1000, scoped, tag = 'output window, operand 0, single buffered']
    #allocation3 [shape = 's32[1]{0}', space=sflag, size = 0x4, scoped, tag = 'scoped memory for linearnet_forward_padded.1']
    %12 = vsyncpa [#allocation3], 0
    // Predicated region
    $region2: #{linearnet_forward_padded.1} parent=1 // pred_check
      _
    $region3: #{linearnet_forward_padded.1} parent=1 // pred_check_branch
      %14 = sbr.rel (0) target = $region5
    $region4: #{linearnet_forward_padded.1} parent=1 // pred_region
      _
    $region5: #{linearnet_forward_padded.1} parent=1 // pred_fallthru
      _
    // Predicated region
    $region6: #{linearnet_forward_padded.1} parent=1 // pred_check
      _
    $region7: #{linearnet_forward_padded.1} parent=1 // pred_check_branch
      %16 = sbr.rel (0) target = $region9
    $region8: #{linearnet_forward_padded.1} parent=1 // pred_region
      _
    $region9: #{linearnet_forward_padded.1} parent=1 // pred_fallthru
      _
    // Predicated region
    $region10: #{linearnet_forward_padded.1} parent=1 // pred_check
      _
    $region11: #{linearnet_forward_padded.1} parent=1 // pred_check_branch
      %18 = sbr.rel (0) target = $region13
    $region12: #{linearnet_forward_padded.1} parent=1 // pred_region
      _
    $region13: #{linearnet_forward_padded.1} parent=1 // pred_fallthru
      _
    // Predicated region
    $region14: #{linearnet_forward_padded.1} parent=1 // pred_check
      _
    $region15: #{linearnet_forward_padded.1} parent=1 // pred_check_branch
      %20 = sbr.rel (0) target = $region17
    $region16: #{linearnet_forward_padded.1} parent=1 // pred_region
      _
    $region17: #{linearnet_forward_padded.1} parent=1 // pred_fallthru
      _
    // Predicated region
    $region18: #{linearnet_forward_padded.1} parent=1 // pred_check
      _
    $region19: #{linearnet_forward_padded.1} parent=1 // pred_check_branch
      %22 = sbr.rel (0) target = $region21
    $region20: #{linearnet_forward_padded.1} parent=1 // pred_region
      _
    $region21: #{linearnet_forward_padded.1} parent=1 // pred_fallthru
      _
    // Predicated region
    $region22: #{linearnet_forward_padded.1} parent=1 // pred_check
      _
    $region23: #{linearnet_forward_padded.1} parent=1 // pred_check_branch
      %24 = sbr.rel (0) target = $region25
    $region24: #{linearnet_forward_padded.1} parent=1 // pred_region
      _
    $region25: #{linearnet_forward_padded.1} parent=1 // pred_fallthru
      _
    // Predicated region
    $region26: #{linearnet_forward_padded.1} parent=1 // pred_check
      _
    $region27: #{linearnet_forward_padded.1} parent=1 // pred_check_branch
      %26 = sbr.rel (0) target = $region29
    $region28: #{linearnet_forward_padded.1} parent=1 // pred_region
      _
    $region29: #{linearnet_forward_padded.1} parent=1 // pred_fallthru
      _
    %v28 = vld [vmem:[%s0] sm:$0xff]
    %v29 = vld [vmem:[%s0 + $0x8] sm:$0xff]
    %v30 = vld [vmem:[%s0 + $0x10] sm:$0xff]
    %v31 = vld [vmem:[%s0 + $0x18] sm:$0xff]
    %v32 = vld [vmem:[%s0 + $0x20] sm:$0xff]
    %v33 = vld [vmem:[%s0 + $0x28] sm:$0xff]
    %v34 = vld [vmem:[%s0 + $0x30] sm:$0xff]
    %v35 = vld [vmem:[%s0 + $0x38] sm:$0xff]
    %v36 = vld [vmem:[%s0 + $0x40] sm:$0xff]
    %v37 = vld [vmem:[%s0 + $0x48] sm:$0xff]
    %v38 = vld [vmem:[%s0 + $0x50] sm:$0xff]
    %v39 = vld [vmem:[%s0 + $0x58] sm:$0xff]
    %v40 = vld [vmem:[%s0 + $0x60] sm:$0xff]
    %v41 = vld [vmem:[%s0 + $0x68] sm:$0xff]
    %v42 = vpack.c.bf16 %v35, %v28
    %v43 = vpack.c.bf16 %v36, %v29
    %v44 = vpack.c.bf16 %v37, %v30
    %v45 = vpack.c.bf16 %v38, %v31
    %v46 = vpack.c.bf16 %v39, %v32
    %v47 = vpack.c.bf16 %v40, %v33
    %v48 = vpack.c.bf16 %v41, %v34
    %v49 = vld [vmem:[%s1] sm:$0xf]
    %v50 = vld [vmem:[%s1 + $0x4] sm:$0xf]
    %v51 = vld [vmem:[%s1 + $0x8] sm:$0xf]
    %v52 = vld [vmem:[%s1 + $0xc] sm:$0xf]
    %v53 = vld [vmem:[%s1 + $0x10] sm:$0xf]
    %v54 = vld [vmem:[%s1 + $0x14] sm:$0xf]
    %v55 = vld [vmem:[%s1 + $0x18] sm:$0xf]
    %v56 = vld [vmem:[%s1 + $0x1c] sm:$0xf]
    %v57 = vld [vmem:[%s1 + $0x20] sm:$0xf]
    %v58 = vld [vmem:[%s1 + $0x24] sm:$0xf]
    %v59 = vld [vmem:[%s1 + $0x28] sm:$0xf]
    %v60 = vld [vmem:[%s1 + $0x2c] sm:$0xf]
    %v61 = vld [vmem:[%s1 + $0x30] sm:$0xf]
    %v62 = vld [vmem:[%s1 + $0x34] sm:$0xf]
    %v63 = vld [vmem:[%s1 + $0x38] sm:$0xf]
    %v64 = vld [vmem:[%s1 + $0x3c] sm:$0xf]
    %v65 = vld [vmem:[%s1 + $0x40] sm:$0xf]
    %v66 = vld [vmem:[%s1 + $0x44] sm:$0xf]
    %v67 = vld [vmem:[%s1 + $0x48] sm:$0xf]
    %v68 = vld [vmem:[%s1 + $0x4c] sm:$0xf]
    %v69 = vld [vmem:[%s1 + $0x50] sm:$0xf]
    %v70 = vld [vmem:[%s1 + $0x54] sm:$0xf]
    %v71 = vld [vmem:[%s1 + $0x58] sm:$0xf]
    %v72 = vld [vmem:[%s1 + $0x5c] sm:$0xf]
    %v73 = vld [vmem:[%s1 + $0x60] sm:$0xf]
    %v74 = vld [vmem:[%s1 + $0x64] sm:$0xf]
    %v75 = vld [vmem:[%s1 + $0x68] sm:$0xf]
    %v76 = vld [vmem:[%s1 + $0x6c] sm:$0xf]
    %v77 = vld [vmem:[%s1 + $0x70] sm:$0xf]
    %v78 = vld [vmem:[%s1 + $0x74] sm:$0xf]
    %v79 = vld [vmem:[%s1 + $0x78] sm:$0xf]
    %v80 = vld [vmem:[%s1 + $0x7c] sm:$0xf]
    %v81 = vld [vmem:[%s1 + $0x80] sm:$0xf]
    %v82 = vld [vmem:[%s1 + $0x84] sm:$0xf]
    %v83 = vld [vmem:[%s1 + $0x88] sm:$0xf]
    %v84 = vld [vmem:[%s1 + $0x8c] sm:$0xf]
    %v85 = vld [vmem:[%s1 + $0x90] sm:$0xf]
    %v86 = vld [vmem:[%s1 + $0x94] sm:$0xf]
    %v87 = vld [vmem:[%s1 + $0x98] sm:$0xf]
    %v88 = vld [vmem:[%s1 + $0x9c] sm:$0xf]
    %v89 = vld [vmem:[%s1 + $0xa0] sm:$0xf]
    %v90 = vld [vmem:[%s1 + $0xa4] sm:$0xf]
    %v91 = vld [vmem:[%s1 + $0xa8] sm:$0xf]
    %v92 = vld [vmem:[%s1 + $0xac] sm:$0xf]
    %v93 = vld [vmem:[%s1 + $0xb0] sm:$0xf]
    %v94 = vld [vmem:[%s1 + $0xb4] sm:$0xf]
    %v95 = vld [vmem:[%s1 + $0xb8] sm:$0xf]
    %v96 = vld [vmem:[%s1 + $0xbc] sm:$0xf]
    %v97 = vld [vmem:[%s1 + $0xc0] sm:$0xf]
    %v98 = vld [vmem:[%s1 + $0xc4] sm:$0xf]
    %v99 = vld [vmem:[%s1 + $0xc8] sm:$0xf]
    %v100 = vld [vmem:[%s1 + $0xcc] sm:$0xf]
    %v101 = vld [vmem:[%s1 + $0xd0] sm:$0xf]
    %v102 = vld [vmem:[%s1 + $0xd4] sm:$0xf]
    %v103 = vld [vmem:[%s1 + $0xd8] sm:$0xf]
    %v104 = vld [vmem:[%s1 + $0xdc] sm:$0xf]
    %v105 = vld [vmem:[%s1 + $0xe0] sm:$0xf]
    %v106 = vld [vmem:[%s1 + $0xe4] sm:$0xf]
    %v107 = vld [vmem:[%s1 + $0xe8] sm:$0xf]
    %v108 = vld [vmem:[%s1 + $0xec] sm:$0xf]
    %v109 = vld [vmem:[%s1 + $0xf0] sm:$0xf]
    %v110 = vld [vmem:[%s1 + $0xf4] sm:$0xf]
    %v111 = vld [vmem:[%s1 + $0xf8] sm:$0xf]
    %v112 = vld [vmem:[%s1 + $0xfc] sm:$0xf]
    %v113 = vld [vmem:[%s1 + $0x100] sm:$0xf]
    %v114 = vld [vmem:[%s1 + $0x104] sm:$0xf]
    %v115 = vld [vmem:[%s1 + $0x108] sm:$0xf]
    %v116 = vld [vmem:[%s1 + $0x10c] sm:$0xf]
    %v117 = vld [vmem:[%s1 + $0x110] sm:$0xf]
    %v118 = vld [vmem:[%s1 + $0x114] sm:$0xf]
    %v119 = vld [vmem:[%s1 + $0x118] sm:$0xf]
    %v120 = vld [vmem:[%s1 + $0x11c] sm:$0xf]
    %v121 = vld [vmem:[%s1 + $0x120] sm:$0xf]
    %v122 = vld [vmem:[%s1 + $0x124] sm:$0xf]
    %v123 = vld [vmem:[%s1 + $0x128] sm:$0xf]
    %v124 = vld [vmem:[%s1 + $0x12c] sm:$0xf]
    %v125 = vld [vmem:[%s1 + $0x130] sm:$0xf]
    %v126 = vld [vmem:[%s1 + $0x134] sm:$0xf]
    %v127 = vld [vmem:[%s1 + $0x138] sm:$0xf]
    %v128 = vld [vmem:[%s1 + $0x13c] sm:$0xf]
    %v129 = vld [vmem:[%s1 + $0x140] sm:$0xf]
    %v130 = vld [vmem:[%s1 + $0x144] sm:$0xf]
    %v131 = vld [vmem:[%s1 + $0x148] sm:$0xf]
    %v132 = vld [vmem:[%s1 + $0x14c] sm:$0xf]
    %v133 = vld [vmem:[%s1 + $0x150] sm:$0xf]
    %v134 = vld [vmem:[%s1 + $0x154] sm:$0xf]
    %v135 = vld [vmem:[%s1 + $0x158] sm:$0xf]
    %v136 = vld [vmem:[%s1 + $0x15c] sm:$0xf]
    %v137 = vld [vmem:[%s1 + $0x160] sm:$0xf]
    %v138 = vld [vmem:[%s1 + $0x164] sm:$0xf]
    %v139 = vld [vmem:[%s1 + $0x168] sm:$0xf]
    %v140 = vld [vmem:[%s1 + $0x16c] sm:$0xf]
    %v141 = vld [vmem:[%s1 + $0x170] sm:$0xf]
    %v142 = vld [vmem:[%s1 + $0x174] sm:$0xf]
    %v143 = vld [vmem:[%s1 + $0x178] sm:$0xf]
    %v144 = vld [vmem:[%s1 + $0x17c] sm:$0xf]
    %v145 = vld [vmem:[%s1 + $0x180] sm:$0xf]
    %v146 = vld [vmem:[%s1 + $0x184] sm:$0xf]
    %v147 = vld [vmem:[%s2] sm:$0x1]
    %v149 = vlaneseq
    %v150 = vshrl.u32 %v149, 7
    %v151 = vsub.s32 0, %v150
    %v152 = vrot.slane %v147, %v151
    %v252 = vunpack.c.l.b16 %v49
    %v253 = vunpack.c.l.b16 %v50
    %v254 = vunpack.c.l.b16 %v51
    %v255 = vunpack.c.l.b16 %v52
    %v256 = vunpack.c.l.b16 %v53
    %v257 = vunpack.c.l.b16 %v54
    %v258 = vunpack.c.l.b16 %v55
    %v259 = vunpack.c.l.b16 %v56
    %v260 = vunpack.c.l.b16 %v57
    %v261 = vunpack.c.l.b16 %v58
    %v262 = vunpack.c.l.b16 %v59
    %v263 = vunpack.c.l.b16 %v60
    %v264 = vunpack.c.l.b16 %v61
    %v265 = vunpack.c.l.b16 %v62
    %v266 = vunpack.c.l.b16 %v63
    %v267 = vunpack.c.l.b16 %v64
    %v268 = vunpack.c.l.b16 %v65
    %v269 = vunpack.c.l.b16 %v66
    %v270 = vunpack.c.l.b16 %v67
    %v271 = vunpack.c.l.b16 %v68
    %v272 = vunpack.c.l.b16 %v69
    %v273 = vunpack.c.l.b16 %v70
    %v274 = vunpack.c.l.b16 %v71
    %v275 = vunpack.c.l.b16 %v72
    %v276 = vunpack.c.l.b16 %v73
    %v277 = vunpack.c.l.b16 %v74
    %v278 = vunpack.c.l.b16 %v75
    %v279 = vunpack.c.l.b16 %v76
    %v280 = vunpack.c.l.b16 %v77
    %v281 = vunpack.c.l.b16 %v78
    %v282 = vunpack.c.l.b16 %v79
    %v283 = vunpack.c.l.b16 %v80
    %v284 = vunpack.c.l.b16 %v81
    %v285 = vunpack.c.l.b16 %v82
    %v286 = vunpack.c.l.b16 %v83
    %v287 = vunpack.c.l.b16 %v84
    %v288 = vunpack.c.l.b16 %v85
    %v289 = vunpack.c.l.b16 %v86
    %v290 = vunpack.c.l.b16 %v87
    %v291 = vunpack.c.l.b16 %v88
    %v292 = vunpack.c.l.b16 %v89
    %v293 = vunpack.c.l.b16 %v90
    %v294 = vunpack.c.l.b16 %v91
    %v295 = vunpack.c.l.b16 %v92
    %v296 = vunpack.c.l.b16 %v93
    %v297 = vunpack.c.l.b16 %v94
    %v298 = vunpack.c.l.b16 %v95
    %v299 = vunpack.c.l.b16 %v96
    %v300 = vunpack.c.l.b16 %v97
    %v301 = vunpack.c.l.b16 %v98
    %v302 = vunpack.c.l.b16 %v99
    %v303 = vunpack.c.l.b16 %v100
    %v304 = vunpack.c.l.b16 %v101
    %v305 = vunpack.c.l.b16 %v102
    %v306 = vunpack.c.l.b16 %v103
    %v307 = vunpack.c.l.b16 %v104
    %v308 = vunpack.c.l.b16 %v105
    %v309 = vunpack.c.l.b16 %v106
    %v310 = vunpack.c.l.b16 %v107
    %v311 = vunpack.c.l.b16 %v108
    %v312 = vunpack.c.l.b16 %v109
    %v313 = vunpack.c.l.b16 %v110
    %v314 = vunpack.c.l.b16 %v111
    %v315 = vunpack.c.l.b16 %v112
    %v316 = vunpack.c.l.b16 %v113
    %v317 = vunpack.c.l.b16 %v114
    %v318 = vunpack.c.l.b16 %v115
    %v319 = vunpack.c.l.b16 %v116
    %v320 = vunpack.c.l.b16 %v117
    %v321 = vunpack.c.l.b16 %v118
    %v322 = vunpack.c.l.b16 %v119
    %v323 = vunpack.c.l.b16 %v120
    %v324 = vunpack.c.l.b16 %v121
    %v325 = vunpack.c.l.b16 %v122
    %v326 = vunpack.c.l.b16 %v123
    %v327 = vunpack.c.l.b16 %v124
    %v328 = vunpack.c.l.b16 %v125
    %v329 = vunpack.c.l.b16 %v126
    %v330 = vunpack.c.l.b16 %v127
    %v331 = vunpack.c.l.b16 %v128
    %v332 = vunpack.c.l.b16 %v129
    %v333 = vunpack.c.l.b16 %v130
    %v334 = vunpack.c.l.b16 %v131
    %v335 = vunpack.c.l.b16 %v132
    %v336 = vunpack.c.l.b16 %v133
    %v337 = vunpack.c.l.b16 %v134
    %v338 = vunpack.c.l.b16 %v135
    %v339 = vunpack.c.l.b16 %v136
    %v340 = vunpack.c.l.b16 %v137
    %v341 = vunpack.c.l.b16 %v138
    %v342 = vunpack.c.l.b16 %v139
    %v343 = vunpack.c.l.b16 %v140
    %v344 = vunpack.c.l.b16 %v141
    %v345 = vunpack.c.l.b16 %v142
    %v346 = vunpack.c.l.b16 %v143
    %v347 = vunpack.c.l.b16 %v144
    %v348 = vunpack.c.l.b16 %v145
    %v349 = vunpack.c.l.b16 %v146
    %v350 = vpack.c.b16 %v253, %v252
    %v351 = vpack.c.b16 %v255, %v254
    %v352 = vpack.c.b16 %v257, %v256
    %v353 = vpack.c.b16 %v259, %v258
    %v354 = vpack.c.b16 %v261, %v260
    %v355 = vpack.c.b16 %v263, %v262
    %v356 = vpack.c.b16 %v265, %v264
    %v357 = vpack.c.b16 %v267, %v266
    %v358 = vpack.c.b16 %v269, %v268
    %v359 = vpack.c.b16 %v271, %v270
    %v360 = vpack.c.b16 %v273, %v272
    %v361 = vpack.c.b16 %v275, %v274
    %v362 = vpack.c.b16 %v277, %v276
    %v363 = vpack.c.b16 %v279, %v278
    %v364 = vpack.c.b16 %v281, %v280
    %v365 = vpack.c.b16 %v283, %v282
    %v366 = vpack.c.b16 %v285, %v284
    %v367 = vpack.c.b16 %v287, %v286
    %v368 = vpack.c.b16 %v289, %v288
    %v369 = vpack.c.b16 %v291, %v290
    %v370 = vpack.c.b16 %v293, %v292
    %v371 = vpack.c.b16 %v295, %v294
    %v372 = vpack.c.b16 %v297, %v296
    %v373 = vpack.c.b16 %v299, %v298
    %v374 = vpack.c.b16 %v301, %v300
    %v375 = vpack.c.b16 %v303, %v302
    %v376 = vpack.c.b16 %v305, %v304
    %v377 = vpack.c.b16 %v307, %v306
    %v378 = vpack.c.b16 %v309, %v308
    %v379 = vpack.c.b16 %v311, %v310
    %v380 = vpack.c.b16 %v313, %v312
    %v381 = vpack.c.b16 %v315, %v314
    %v382 = vpack.c.b16 %v317, %v316
    %v383 = vpack.c.b16 %v319, %v318
    %v384 = vpack.c.b16 %v321, %v320
    %v385 = vpack.c.b16 %v323, %v322
    %v386 = vpack.c.b16 %v325, %v324
    %v387 = vpack.c.b16 %v327, %v326
    %v388 = vpack.c.b16 %v329, %v328
    %v389 = vpack.c.b16 %v331, %v330
    %v390 = vpack.c.b16 %v333, %v332
    %v391 = vpack.c.b16 %v335, %v334
    %v392 = vpack.c.b16 %v337, %v336
    %v393 = vpack.c.b16 %v339, %v338
    %v394 = vpack.c.b16 %v341, %v340
    %v395 = vpack.c.b16 %v343, %v342
    %v396 = vpack.c.b16 %v345, %v344
    %v397 = vpack.c.b16 %v347, %v346
    %v398 = vpack.c.b16 %v349, %v348
    %vm448 = vcmask 130048
    %v450 = vsel %vm448, %v48, 0
    %452 = vmatprep.subr.bf16.mxu0 0
    %453 = vmatpush1.bf16.msra.mxu0 %v357
    %454 = vmatprep.subr.bf16.mxu0 0
    %455 = vmatpush1.bf16.msra.mxu0 %v356
    %456 = vmatprep.subr.bf16.mxu0 0
    %457 = vmatpush1.bf16.msra.mxu0 %v355
    %458 = vmatprep.subr.bf16.mxu0 0
    %459 = vmatpush1.bf16.msra.mxu0 %v354
    %460 = vmatprep.subr.bf16.mxu0 0
    %461 = vmatpush1.bf16.msra.mxu0 %v353
    %462 = vmatprep.subr.bf16.mxu0 0
    %463 = vmatpush1.bf16.msra.mxu0 %v352
    %464 = vmatprep.subr.bf16.mxu0 0
    %465 = vmatpush1.bf16.msra.mxu0 %v351
    %466 = vmatprep.subr.bf16.mxu0 0
    %467 = vmatpush1.bf16.msra.mxu0 %v350
    %468 = vmatprep.subr.bf16.mxu0 0
    %469 = vmatpush2.bf16.msra.mxu0 %v365
    %470 = vmatprep.subr.bf16.mxu0 0
    %471 = vmatpush2.bf16.msra.mxu0 %v364
    %472 = vmatprep.subr.bf16.mxu0 0
    %473 = vmatpush2.bf16.msra.mxu0 %v363
    %474 = vmatprep.subr.bf16.mxu0 0
    %475 = vmatpush2.bf16.msra.mxu0 %v362
    %476 = vmatprep.subr.bf16.mxu0 0
    %477 = vmatpush2.bf16.msra.mxu0 %v361
    %478 = vmatprep.subr.bf16.mxu0 0
    %479 = vmatpush2.bf16.msra.mxu0 %v360
    %480 = vmatprep.subr.bf16.mxu0 0
    %481 = vmatpush2.bf16.msra.mxu0 %v359
    %482 = vmatprep.subr.bf16.mxu0 0
    %483 = vmatpush2.bf16.msra.mxu0 %v358
    %484 = vmatprep.mubr.bf16.mxu0 %v43
    %485 = vmatmul.mubr.bf16.gmra.mxu0 %v42
    %v486 = vpop.f32.mrf.mxu0
    %v487 = vadd.f32 %v152, %v486
    %v488 = vpop.f32.mrf.mxu0
    %v489 = vpop.f32.mrf.mxu0
    %v490 = vadd.f32 %v152, %v489
    %v491 = vpop.f32.mrf.mxu0
    %492 = vdwg.mxu0
    %493 = vmatprep.subr.bf16.mxu0 0
    %494 = vmatpush1.bf16.msra.mxu0 %v373
    %495 = vmatprep.subr.bf16.mxu0 0
    %496 = vmatpush1.bf16.msra.mxu0 %v372
    %497 = vmatprep.subr.bf16.mxu0 0
    %498 = vmatpush1.bf16.msra.mxu0 %v371
    %499 = vmatprep.subr.bf16.mxu0 0
    %500 = vmatpush1.bf16.msra.mxu0 %v370
    %501 = vmatprep.subr.bf16.mxu0 0
    %502 = vmatpush1.bf16.msra.mxu0 %v369
    %503 = vmatprep.subr.bf16.mxu0 0
    %504 = vmatpush1.bf16.msra.mxu0 %v368
    %505 = vmatprep.subr.bf16.mxu0 0
    %506 = vmatpush1.bf16.msra.mxu0 %v367
    %507 = vmatprep.subr.bf16.mxu0 0
    %508 = vmatpush1.bf16.msra.mxu0 %v366
    %509 = vmatprep.subr.bf16.mxu0 0
    %510 = vmatpush2.bf16.msra.mxu0 %v381
    %511 = vmatprep.subr.bf16.mxu0 0
    %512 = vmatpush2.bf16.msra.mxu0 %v380
    %513 = vmatprep.subr.bf16.mxu0 0
    %514 = vmatpush2.bf16.msra.mxu0 %v379
    %515 = vmatprep.subr.bf16.mxu0 0
    %516 = vmatpush2.bf16.msra.mxu0 %v378
    %517 = vmatprep.subr.bf16.mxu0 0
    %518 = vmatpush2.bf16.msra.mxu0 %v377
    %519 = vmatprep.subr.bf16.mxu0 0
    %520 = vmatpush2.bf16.msra.mxu0 %v376
    %521 = vmatprep.subr.bf16.mxu0 0
    %522 = vmatpush2.bf16.msra.mxu0 %v375
    %523 = vmatprep.subr.bf16.mxu0 0
    %524 = vmatpush2.bf16.msra.mxu0 %v374
    %525 = vmatprep.mubr.bf16.mxu0 %v45
    %526 = vmatmul.mubr.bf16.gmra.mxu0 %v44
    %v527 = vpop.f32.mrf.mxu0
    %v528 = vadd.f32 %v487, %v527
    %v529 = vpop.f32.mrf.mxu0
    %v530 = vpop.f32.mrf.mxu0
    %v531 = vadd.f32 %v490, %v530
    %v532 = vpop.f32.mrf.mxu0
    %533 = vdwg.mxu0
    %534 = vmatprep.subr.bf16.mxu0 0
    %535 = vmatpush1.bf16.msra.mxu0 %v389
    %536 = vmatprep.subr.bf16.mxu0 0
    %537 = vmatpush1.bf16.msra.mxu0 %v388
    %538 = vmatprep.subr.bf16.mxu0 0
    %539 = vmatpush1.bf16.msra.mxu0 %v387
    %540 = vmatprep.subr.bf16.mxu0 0
    %541 = vmatpush1.bf16.msra.mxu0 %v386
    %542 = vmatprep.subr.bf16.mxu0 0
    %543 = vmatpush1.bf16.msra.mxu0 %v385
    %544 = vmatprep.subr.bf16.mxu0 0
    %545 = vmatpush1.bf16.msra.mxu0 %v384
    %546 = vmatprep.subr.bf16.mxu0 0
    %547 = vmatpush1.bf16.msra.mxu0 %v383
    %548 = vmatprep.subr.bf16.mxu0 0
    %549 = vmatpush1.bf16.msra.mxu0 %v382
    %550 = vmatprep.subr.bf16.mxu0 0
    %551 = vmatpush2.bf16.msra.mxu0 %v397
    %552 = vmatprep.subr.bf16.mxu0 0
    %553 = vmatpush2.bf16.msra.mxu0 %v396
    %554 = vmatprep.subr.bf16.mxu0 0
    %555 = vmatpush2.bf16.msra.mxu0 %v395
    %556 = vmatprep.subr.bf16.mxu0 0
    %557 = vmatpush2.bf16.msra.mxu0 %v394
    %558 = vmatprep.subr.bf16.mxu0 0
    %559 = vmatpush2.bf16.msra.mxu0 %v393
    %560 = vmatprep.subr.bf16.mxu0 0
    %561 = vmatpush2.bf16.msra.mxu0 %v392
    %562 = vmatprep.subr.bf16.mxu0 0
    %563 = vmatpush2.bf16.msra.mxu0 %v391
    %564 = vmatprep.subr.bf16.mxu0 0
    %565 = vmatpush2.bf16.msra.mxu0 %v390
    %566 = vmatprep.mubr.bf16.mxu0 %v47
    %567 = vmatmul.mubr.bf16.gmra.mxu0 %v46
    %v568 = vpop.f32.mrf.mxu0
    %v569 = vadd.f32 %v528, %v568
    %v570 = vpop.f32.mrf.mxu0
    %v571 = vpop.f32.mrf.mxu0
    %v572 = vadd.f32 %v531, %v571
    %v573 = vpop.f32.mrf.mxu0
    %574 = vdwg.mxu0
    %575 = vmatprep.subr.bf16.mxu0 0
    %576 = vmatpush1.bf16.msra.mxu0 0
    %577 = vmatprep.subr.bf16.mxu0 0
    %578 = vmatpush1.bf16.msra.mxu0 0
    %579 = vmatprep.subr.bf16.mxu0 0
    %580 = vmatpush1.bf16.msra.mxu0 0
    %581 = vmatprep.subr.bf16.mxu0 0
    %582 = vmatpush1.bf16.msra.mxu0 0
    %583 = vmatprep.subr.bf16.mxu0 0
    %584 = vmatpush1.bf16.msra.mxu0 0
    %585 = vmatprep.subr.bf16.mxu0 0
    %586 = vmatpush1.bf16.msra.mxu0 0
    %587 = vmatprep.subr.bf16.mxu0 0
    %588 = vmatpush1.bf16.msra.mxu0 0
    %589 = vmatprep.subr.bf16.mxu0 0
    %590 = vmatpush1.bf16.msra.mxu0 %v398
    %591 = vmatprep.subr.bf16.mxu0 0
    %592 = vmatpush2.bf16.msra.mxu0 0
    %593 = vmatprep.subr.bf16.mxu0 0
    %594 = vmatpush2.bf16.msra.mxu0 0
    %595 = vmatprep.subr.bf16.mxu0 0
    %596 = vmatpush2.bf16.msra.mxu0 0
    %597 = vmatprep.subr.bf16.mxu0 0
    %598 = vmatpush2.bf16.msra.mxu0 0
    %599 = vmatprep.subr.bf16.mxu0 0
    %600 = vmatpush2.bf16.msra.mxu0 0
    %601 = vmatprep.subr.bf16.mxu0 0
    %602 = vmatpush2.bf16.msra.mxu0 0
    %603 = vmatprep.subr.bf16.mxu0 0
    %604 = vmatpush2.bf16.msra.mxu0 0
    %605 = vmatprep.subr.bf16.mxu0 0
    %606 = vmatpush2.bf16.msra.mxu0 0
    %607 = vmatprep.mubr.bf16.mxu0 0
    %608 = vmatmul.mubr.bf16.gmra.mxu0 %v450
    %v609 = vpop.f32.mrf.mxu0
    %v610 = vadd.f32 %v569, %v609
    %v611 = vpop.f32.mrf.mxu0
    %v612 = vpop.f32.mrf.mxu0
    %v613 = vadd.f32 %v572, %v612
    %v614 = vpop.f32.mrf.mxu0
    %615 = vdwg.mxu0
    %v616 = vmax.f32 %v610, 0.0
    %v617 = vmax.f32 %v613, 0.0
    %v618 = vpack.c.bf16 %v617, %v616
    %v619 = vld [vmem:[%s3] sm:$0xf]
    %v620 = vld [vmem:[%s3 + $0x4] sm:$0xf]
    %v621 = vld [vmem:[%s3 + $0x8] sm:$0xf]
    %v622 = vld [vmem:[%s3 + $0xc] sm:$0xf]
    %v623 = vld [vmem:[%s3 + $0x10] sm:$0xf]
    %v624 = vld [vmem:[%s3 + $0x14] sm:$0xf]
    %v625 = vld [vmem:[%s3 + $0x18] sm:$0xf]
    %v626 = vld [vmem:[%s3 + $0x1c] sm:$0xf]
    %v627 = vld [vmem:[%s3 + $0x20] sm:$0xf]
    %v628 = vld [vmem:[%s3 + $0x24] sm:$0xf]
    %v629 = vld [vmem:[%s3 + $0x28] sm:$0xf]
    %v630 = vld [vmem:[%s3 + $0x2c] sm:$0xf]
    %v631 = vld [vmem:[%s3 + $0x30] sm:$0xf]
    %v632 = vld [vmem:[%s3 + $0x34] sm:$0xf]
    %v633 = vld [vmem:[%s3 + $0x38] sm:$0xf]
    %v634 = vld [vmem:[%s3 + $0x3c] sm:$0xf]
    %v635 = vld [vmem:[%s4] sm:$0x1]
    %v637 = vlaneseq
    %v638 = vshrl.u32 %v637, 7
    %v639 = vsub.s32 0, %v638
    %v640 = vrot.slane %v635, %v639
    %v658 = vunpack.c.l.b16 %v619
    %v659 = vunpack.c.l.b16 %v620
    %v660 = vunpack.c.l.b16 %v621
    %v661 = vunpack.c.l.b16 %v622
    %v662 = vunpack.c.l.b16 %v623
    %v663 = vunpack.c.l.b16 %v624
    %v664 = vunpack.c.l.b16 %v625
    %v665 = vunpack.c.l.b16 %v626
    %v666 = vunpack.c.l.b16 %v627
    %v667 = vunpack.c.l.b16 %v628
    %v668 = vunpack.c.l.b16 %v629
    %v669 = vunpack.c.l.b16 %v630
    %v670 = vunpack.c.l.b16 %v631
    %v671 = vunpack.c.l.b16 %v632
    %v672 = vunpack.c.l.b16 %v633
    %v673 = vunpack.c.l.b16 %v634
    %v674 = vpack.c.b16 %v659, %v658
    %v675 = vpack.c.b16 %v661, %v660
    %v676 = vpack.c.b16 %v663, %v662
    %v677 = vpack.c.b16 %v665, %v664
    %v678 = vpack.c.b16 %v667, %v666
    %v679 = vpack.c.b16 %v669, %v668
    %v680 = vpack.c.b16 %v671, %v670
    %v681 = vpack.c.b16 %v673, %v672
    %690 = vmatprep.subr.bf16.mxu0 0
    %691 = vmatpush1.bf16.msra.mxu0 %v681
    %692 = vmatprep.subr.bf16.mxu0 0
    %693 = vmatpush1.bf16.msra.mxu0 %v680
    %694 = vmatprep.subr.bf16.mxu0 0
    %695 = vmatpush1.bf16.msra.mxu0 %v679
    %696 = vmatprep.subr.bf16.mxu0 0
    %697 = vmatpush1.bf16.msra.mxu0 %v678
    %698 = vmatprep.subr.bf16.mxu0 0
    %699 = vmatpush1.bf16.msra.mxu0 %v677
    %700 = vmatprep.subr.bf16.mxu0 0
    %701 = vmatpush1.bf16.msra.mxu0 %v676
    %702 = vmatprep.subr.bf16.mxu0 0
    %703 = vmatpush1.bf16.msra.mxu0 %v675
    %704 = vmatprep.subr.bf16.mxu0 0
    %705 = vmatpush1.bf16.msra.mxu0 %v674
    %706 = vmatprep.subr.bf16.mxu0 0
    %707 = vmatpush2.bf16.msra.mxu0 0
    %708 = vmatprep.subr.bf16.mxu0 0
    %709 = vmatpush2.bf16.msra.mxu0 0
    %710 = vmatprep.subr.bf16.mxu0 0
    %711 = vmatpush2.bf16.msra.mxu0 0
    %712 = vmatprep.subr.bf16.mxu0 0
    %713 = vmatpush2.bf16.msra.mxu0 0
    %714 = vmatprep.subr.bf16.mxu0 0
    %715 = vmatpush2.bf16.msra.mxu0 0
    %716 = vmatprep.subr.bf16.mxu0 0
    %717 = vmatpush2.bf16.msra.mxu0 0
    %718 = vmatprep.subr.bf16.mxu0 0
    %719 = vmatpush2.bf16.msra.mxu0 0
    %720 = vmatprep.subr.bf16.mxu0 0
    %721 = vmatpush2.bf16.msra.mxu0 0
    %722 = vmatprep.mubr.bf16.mxu0 0
    %723 = vmatmul.mubr.bf16.gmra.mxu0 %v618
    %v724 = vpop.f32.mrf.mxu0
    %v725 = vadd.f32 %v640, %v724
    %v726 = vpop.f32.mrf.mxu0
    %v727 = vpop.f32.mrf.mxu0
    %v728 = vadd.f32 %v640, %v727
    %v729 = vpop.f32.mrf.mxu0
    %730 = vdwg.mxu0
    %v731 = vmax.f32 %v725, 0.0
    %v732 = vmax.f32 %v728, 0.0
    %v733 = vpack.c.bf16 %v732, %v731
    %v734 = vld [vmem:[%s5] sm:$0xf]
    %v735 = vld [vmem:[%s5 + $0x4] sm:$0xf]
    %v736 = vld [vmem:[%s5 + $0x8] sm:$0xf]
    %v737 = vld [vmem:[%s5 + $0xc] sm:$0xf]
    %v738 = vld [vmem:[%s5 + $0x10] sm:$0xf]
    %v739 = vld [vmem:[%s5 + $0x14] sm:$0xf]
    %v740 = vld [vmem:[%s5 + $0x18] sm:$0xf]
    %v741 = vld [vmem:[%s5 + $0x1c] sm:$0xf]
    %v742 = vld [vmem:[%s5 + $0x20] sm:$0xf]
    %v743 = vld [vmem:[%s5 + $0x24] sm:$0xf]
    %v744 = vld [vmem:[%s5 + $0x28] sm:$0xf]
    %v745 = vld [vmem:[%s5 + $0x2c] sm:$0xf]
    %v746 = vld [vmem:[%s5 + $0x30] sm:$0xf]
    %v747 = vld [vmem:[%s5 + $0x34] sm:$0xf]
    %v748 = vld [vmem:[%s5 + $0x38] sm:$0xf]
    %v749 = vld [vmem:[%s5 + $0x3c] sm:$0xf]
    %v750 = vld [vmem:[%s6] sm:$0x1]
    %v752 = vlaneseq
    %v753 = vshrl.u32 %v752, 7
    %v754 = vsub.s32 0, %v753
    %v755 = vrot.slane %v750, %v754
    %v773 = vunpack.c.l.b16 %v734
    %v774 = vunpack.c.l.b16 %v735
    %v775 = vunpack.c.l.b16 %v736
    %v776 = vunpack.c.l.b16 %v737
    %v777 = vunpack.c.l.b16 %v738
    %v778 = vunpack.c.l.b16 %v739
    %v779 = vunpack.c.l.b16 %v740
    %v780 = vunpack.c.l.b16 %v741
    %v781 = vunpack.c.l.b16 %v742
    %v782 = vunpack.c.l.b16 %v743
    %v783 = vunpack.c.l.b16 %v744
    %v784 = vunpack.c.l.b16 %v745
    %v785 = vunpack.c.l.b16 %v746
    %v786 = vunpack.c.l.b16 %v747
    %v787 = vunpack.c.l.b16 %v748
    %v788 = vunpack.c.l.b16 %v749
    %v789 = vpack.c.b16 %v774, %v773
    %v790 = vpack.c.b16 %v776, %v775
    %v791 = vpack.c.b16 %v778, %v777
    %v792 = vpack.c.b16 %v780, %v779
    %v793 = vpack.c.b16 %v782, %v781
    %v794 = vpack.c.b16 %v784, %v783
    %v795 = vpack.c.b16 %v786, %v785
    %v796 = vpack.c.b16 %v788, %v787
    %805 = vmatprep.subr.bf16.mxu0 0
    %806 = vmatpush1.bf16.msra.mxu0 %v796
    %807 = vmatprep.subr.bf16.mxu0 0
    %808 = vmatpush1.bf16.msra.mxu0 %v795
    %809 = vmatprep.subr.bf16.mxu0 0
    %810 = vmatpush1.bf16.msra.mxu0 %v794
    %811 = vmatprep.subr.bf16.mxu0 0
    %812 = vmatpush1.bf16.msra.mxu0 %v793
    %813 = vmatprep.subr.bf16.mxu0 0
    %814 = vmatpush1.bf16.msra.mxu0 %v792
    %815 = vmatprep.subr.bf16.mxu0 0
    %816 = vmatpush1.bf16.msra.mxu0 %v791
    %817 = vmatprep.subr.bf16.mxu0 0
    %818 = vmatpush1.bf16.msra.mxu0 %v790
    %819 = vmatprep.subr.bf16.mxu0 0
    %820 = vmatpush1.bf16.msra.mxu0 %v789
    %821 = vmatprep.subr.bf16.mxu0 0
    %822 = vmatpush2.bf16.msra.mxu0 0
    %823 = vmatprep.subr.bf16.mxu0 0
    %824 = vmatpush2.bf16.msra.mxu0 0
    %825 = vmatprep.subr.bf16.mxu0 0
    %826 = vmatpush2.bf16.msra.mxu0 0
    %827 = vmatprep.subr.bf16.mxu0 0
    %828 = vmatpush2.bf16.msra.mxu0 0
    %829 = vmatprep.subr.bf16.mxu0 0
    %830 = vmatpush2.bf16.msra.mxu0 0
    %831 = vmatprep.subr.bf16.mxu0 0
    %832 = vmatpush2.bf16.msra.mxu0 0
    %833 = vmatprep.subr.bf16.mxu0 0
    %834 = vmatpush2.bf16.msra.mxu0 0
    %835 = vmatprep.subr.bf16.mxu0 0
    %836 = vmatpush2.bf16.msra.mxu0 0
    %837 = vmatprep.mubr.bf16.mxu0 0
    %838 = vmatmul.mubr.bf16.gmra.mxu0 %v733
    %v839 = vpop.f32.mrf.mxu0
    %v840 = vadd.f32 %v755, %v839
    %v841 = vpop.f32.mrf.mxu0
    %v842 = vpop.f32.mrf.mxu0
    %v843 = vadd.f32 %v755, %v842
    %v844 = vpop.f32.mrf.mxu0
    %845 = vdwg.mxu0
    %v846 = vlaneseq
    %v847 = vand.u32 %v846, 127
    %vm848 = vcmp.lt.s32.totalorder %v847, 10
    %v849 = vsel %vm848, %v840, -1e+30
    %v850 = vsel %vm848, %v843, -1e+30
    %851 = vmax.xlane.f32.xlu0 %v849
    %v852 = vpop.xlane.xlu0 %851
    %853 = vmax.xlane.f32.xlu0 %v850
    %v854 = vpop.xlane.xlu0 %853
    %v855 = vsub.f32 %v849, %v852
    %v856 = vsub.f32 %v850, %v854
    %v857 = vmul.f32 %v855, 1.442695
    %v858 = vpow.pop %v857
    %v859 = vmul.f32 %v856, 1.442695
    %v860 = vpow.pop %v859
    %861 = vadd.xlane.f32.xlu0 %v858
    %v862 = vpop.xlane.xlu0 %861
    %863 = vadd.xlane.f32.xlu0 %v860
    %v864 = vpop.xlane.xlu0 %863
    %v865 = vlog2.pop %v862
    %v866 = vmul.f32 %v865, 0.6931472
    %v867 = vlog2.pop %v864
    %v868 = vmul.f32 %v867, 0.6931472
    %v869 = vsub.f32 %v855, %v866
    %v870 = vsub.f32 %v856, %v868
    %v871 = vpack.c.bf16 %v870, %v869
    %v873 = vunpack.c.l.b16 %v871
    %v874 = vunpack.c.h.b16 %v871
    %v875 = vpack.c.b16 %v873, %v873
    %v876 = vpack.c.b16 %v874, %v874
    %879 = vst [vmem:[#allocation2] sm:$0xf] %v875
    %880 = vst [vmem:[#allocation2 + $0x4] sm:$0xf] %v876
    // Predicated region
    $region30: #{linearnet_forward_padded.1} parent=1 // pred_check
      _
    $region31: #{linearnet_forward_padded.1} parent=1 // pred_check_branch
      %882 = sbr.rel (0) target = $region33
    $region32: #{linearnet_forward_padded.1} parent=1 // pred_region
      %s884 = ssub.s32 128, 128
      %885 = vsyncadd [#allocation3], %s884
      %s886 = sshll.u32 [#allocation2], 4
      %s887 = int_to_ptr.vmem [resolvable:$true] %s886
      %892 = dma.vmem_to_hbm [thread:$0]  %s887, 128, %s7, [#allocation3], 64, 64, 4
    $region33: #{linearnet_forward_padded.1} parent=1 // pred_fallthru
      _
    // Predicated region
    $region34: #{linearnet_forward_padded.1} parent=1 // pred_check
      _
    $region35: #{linearnet_forward_padded.1} parent=1 // pred_check_branch
      %894 = sbr.rel (0) target = $region37
    $region36: #{linearnet_forward_padded.1} parent=1 // pred_region
      %895 = dma.done [#allocation3], 128
    $region37: #{linearnet_forward_padded.1} parent=1 // pred_fallthru
      _
    %896 = vsyncpa [#allocation3], 1

</llo_original>
